<compile_context>
chip_gen: v7x
topology: tpu7x:2x2x1
jax: 0.10.0
libtpu: 0.0.40
codegen_flags: <defaults>
</compile_context>

<pallas_src>
import functools

import jax
import jax.numpy as jnp
from jax.experimental import pallas as pl
from jax.experimental.pallas import tpu as pltpu


def _layernorm_kernel(x_ref, g_ref, b_ref, o_ref, *, eps, n):
    # x_ref: (Bt, R, L) slab per sample (no padded tail -> stats are exact).
    # g_ref/b_ref: (R, 1) per-row affine (each row maps to one channel),
    #              broadcast along lanes in-kernel.
    x = x_ref[...].astype(jnp.float32)

    # Shifted single-pass statistics: subtracting a per-sample pivot (first
    # element) before summing avoids the catastrophic cancellation of the raw
    # s2 - s1^2/n form when |mean| >> std.  The extra vsub/elem is pure VPU
    # filler under the HBM-bound DMA.
    pivot = x[:, 0:1, 0:1]                               # (Bt, 1, 1)
    xc = x - pivot
    s1 = jnp.sum(xc, axis=(1, 2), keepdims=True)         # (Bt, 1, 1)
    s2 = jnp.sum(xc * xc, axis=(1, 2), keepdims=True)    # (Bt, 1, 1)
    mean_c = s1 / n                                      # mean - pivot
    # torch .std(): unbiased estimator (N - 1); guard n == 1.
    var = jnp.maximum((s2 - s1 * mean_c) / max(n - 1, 1), 0.0)
    std = jnp.sqrt(var)

    # Per-sample scalars only -> exact reciprocal is effectively free; the
    # per-element divide is hoisted out of the hot pass entirely.
    inv = pl.reciprocal(std + eps, approx=False)          # (Bt, 1, 1)
    shift = -mean_c * inv                                 # (Bt, 1, 1)

    g = g_ref[...].astype(jnp.float32)                    # (R, 1)
    b = b_ref[...].astype(jnp.float32)
    y = xc * inv + shift                                  # normalize (FMA)
    y = y * g[None, :, :] + b[None, :, :]                 # affine     (FMA)
    o_ref[...] = y.astype(o_ref.dtype)


def _plan_tiling(batch, per_sample_bytes):
    """Chip-aware batch tile + VMEM budget.

    v7x  : 2 TensorCores but only 64 MiB VMEM/TC -> keep >=2 (preferably even)
           grid steps so both cores get balanced work; ~8 MiB blocks, <=48 MiB.
    v5e/v6e: 1 TC, 128 MiB VMEM -> extra grid steps buy nothing; allow ~16 MiB
           blocks and a larger budget.
    Falls back to the conservative (v7x-safe) plan if the query fails.
    """
    try:
        vmem_bytes = int(getattr(pltpu.get_tpu_info(), "vmem_capacity_bytes", 0)) or (64 << 20)
    except Exception:
        vmem_bytes = 64 << 20
    two_cores = vmem_bytes <= (64 << 20)  # v7x signature: 64 MiB per TC

    if two_cores:
        target_block, vmem_cap, min_steps = 8 << 20, 48 << 20, 2
    else:
        target_block, vmem_cap, min_steps = 16 << 20, 96 << 20, 1

    candidates = []
    for d in range(1, batch + 1):
        if batch % d:
            continue
        steps = batch // d
        if d * per_sample_bytes > target_block:
            continue
        if batch >= min_steps and steps < min_steps:
            continue
        even_ok = (not two_cores) or steps == 1 or (steps % 2 == 0)
        candidates.append((even_ok, d))
    bt = max(candidates)[1] if candidates else 1

    block_bytes = bt * per_sample_bytes
    # in/out double buffers (~4x block) + tiny (R,1) params + headroom.
    vmem_limit = int(min(vmem_cap, max(32 << 20, 6 * block_bytes)))
    return bt, vmem_limit


def layer_norm(x, gamma, beta, eps=1e-5):
    """x: (B, C, H, W); gamma/beta: (C,).

    Matches the reference torch module: per-sample mean/std over (C,H,W)
    (the B==1 whole-tensor branch is identical to the per-sample one),
    unbiased std (N-1), eps added to std (not var), per-channel affine.
    """
    B, C, H, W = x.shape
    n = C * H * W
    hw = H * W
    lanes = 128

    gamma = gamma.astype(jnp.float32)
    beta = beta.astype(jnp.float32)

    if hw % lanes == 0:
        # Fast path: every 128-lane row of the flattened sample lies inside a
        # single channel, so the affine params collapse to (rows, 1) column
        # vectors (n/32 bytes of HBM, vs. a full sample-sized slab), and
        # x / out are reshaped for free (no pad copy, no un-pad slice).
        rows = n // lanes
        x3 = x.reshape(B, rows, lanes)
        g2 = jnp.repeat(gamma, hw // lanes).reshape(rows, 1)
        b2 = jnp.repeat(beta, hw // lanes).reshape(rows, 1)
        R, L = rows, lanes
    else:
        # Fallback: keep the channel axis explicit; still no padding and the
        # stats stay exact; params stay (C, 1).  Lane/sublane utilisation is
        # lower, but the op is HBM-bound so this only matters at tiny H*W.
        x3 = x.reshape(B, C, hw)
        g2 = gamma.reshape(C, 1)
        b2 = beta.reshape(C, 1)
        R, L = C, hw

    per_sample_bytes = R * L * x.dtype.itemsize
    bt, vmem_limit = _plan_tiling(B, per_sample_bytes)
    # TODO(synk): samples whose ~4x double-buffered footprint exceeds the VMEM
    # budget (>~8-12 MiB/sample on v7x, >~24 MiB on v5e/v6e) should switch to
    # an inner chunked two-pass (accumulate s1/s2 over row chunks, then
    # normalize chunk-wise) instead of whole-sample residency.

    out = pl.pallas_call(
        functools.partial(_layernorm_kernel, eps=eps, n=n),
        out_shape=jax.ShapeDtypeStruct((B, R, L), x.dtype),
        grid_spec=pltpu.PrefetchScalarGridSpec(
            num_scalar_prefetch=0,
            grid=(B // bt,),
            in_specs=[
                pl.BlockSpec((bt, R, L), lambda i: (i, 0, 0)),
                # Constant block index -> DMA'd once and VMEM-resident; at
                # (R, 1) they are a few hundred bytes, so double-buffering
                # them costs nothing (no need for single-buffering tricks).
                pl.BlockSpec((R, 1), lambda i: (0, 0)),
                pl.BlockSpec((R, 1), lambda i: (0, 0)),
            ],
            out_specs=pl.BlockSpec((bt, R, L), lambda i: (i, 0, 0)),
        ),
        compiler_params=pltpu.CompilerParams(
            dimension_semantics=("parallel",),
            vmem_limit_bytes=vmem_limit,
        ),
    )(x3, g2, b2)

    return out.reshape(B, C, H, W)


def _reference(x, gamma, beta, eps=1e-5):
    B = x.shape[0]
    xf = x.reshape(B, -1).astype(jnp.float32)
    mean = xf.mean(axis=1)
    var = jnp.sum((xf - mean[:, None]) ** 2, axis=1) / (xf.shape[1] - 1)
    std = jnp.sqrt(var)
    shape = (B, 1, 1, 1)
    y = (x - mean.reshape(shape)) / (std.reshape(shape) + eps)
    return y * gamma.reshape(1, -1, 1, 1) + beta.reshape(1, -1, 1, 1)


if __name__ == "__main__":
    key = jax.random.PRNGKey(0)
    kx, kg = jax.random.split(key)

    B, C, H, W = 2, 4, 16, 16
    x = jax.random.normal(kx, (B, C, H, W), dtype=jnp.float32)
    # deterministic parameter init mirroring nn.Parameter(Tensor(C).uniform_())
    gamma = jax.random.uniform(kg, (C,), dtype=jnp.float32)
    beta = jnp.zeros((C,), dtype=jnp.float32)

    out = layer_norm(x, gamma, beta, eps=1e-5)
    out = jax.block_until_ready(out)

    ref = _reference(x, gamma, beta, eps=1e-5)
    assert jnp.allclose(out, ref, atol=1e-4, rtol=1e-4), "mismatch vs reference"
    print("KERNEL_OK")
</pallas_src>

<mosaic_0001>
module attributes {stable_mosaic.version = 11 : i64} {
  func.func @_layernorm_kernel(%arg0: i32, %arg1: memref<1x8x128xf32, #tpu.memory_space<vmem>>, %arg2: memref<8x1xf32, #tpu.memory_space<vmem>>, %arg3: memref<8x1xf32, #tpu.memory_space<vmem>>, %arg4: memref<1x8x128xf32, #tpu.memory_space<vmem>>) attributes {dimension_semantics = [#tpu.dimension_semantics<parallel>], iteration_bounds = array<i64: 2>, scalar_prefetch = 0 : i64, scratch_operands = 0 : i64, tpu.core_type = #tpu.core_type<tc>, window_params = [{transform_indices = @transform_0, window_bounds = array<i64: 1, 8, 128>}, {pipeline_mode = #tpu.pipeline_mode<synchronous>, transform_indices = @transform_1, window_bounds = array<i64: 8, 1>}, {pipeline_mode = #tpu.pipeline_mode<synchronous>, transform_indices = @transform_2, window_bounds = array<i64: 8, 1>}, {transform_indices = @transform_3, window_bounds = array<i64: 1, 8, 128>}]} {
    %c0 = arith.constant 0 : index
    %c0_0 = arith.constant 0 : index
    %c0_1 = arith.constant 0 : index
    %0 = vector.load %arg1[%c0, %c0_0, %c0_1] : memref<1x8x128xf32, #tpu.memory_space<vmem>>, vector<1x8x128xf32>
    %1 = vector.extract_strided_slice %0 {offsets = [0, 0, 0], sizes = [1, 1, 1], strides = [1, 1, 1]} : vector<1x8x128xf32> to vector<1x1x1xf32>
    %2 = vector.broadcast %1 : vector<1x1x1xf32> to vector<1x8x128xf32>
    %3 = arith.subf %0, %2 : vector<1x8x128xf32>
    %cst = arith.constant dense<0.000000e+00> : vector<1xf32>
    %4 = vector.multi_reduction <add>, %3, %cst [1, 2] : vector<1x8x128xf32> to vector<1xf32>
    %5 = vector.shape_cast %4 : vector<1xf32> to vector<1x1x1xf32>
    %6 = arith.mulf %3, %3 : vector<1x8x128xf32>
    %cst_2 = arith.constant dense<0.000000e+00> : vector<1xf32>
    %7 = vector.multi_reduction <add>, %6, %cst_2 [1, 2] : vector<1x8x128xf32> to vector<1xf32>
    %8 = vector.shape_cast %7 : vector<1xf32> to vector<1x1x1xf32>
    %cst_3 = arith.constant 1.024000e+03 : f32
    %9 = vector.broadcast %cst_3 : f32 to vector<1x1x1xf32>
    %10 = arith.divf %5, %9 : vector<1x1x1xf32>
    %11 = arith.mulf %5, %10 : vector<1x1x1xf32>
    %12 = arith.subf %8, %11 : vector<1x1x1xf32>
    %cst_4 = arith.constant 1.023000e+03 : f32
    %13 = vector.broadcast %cst_4 : f32 to vector<1x1x1xf32>
    %14 = arith.divf %12, %13 : vector<1x1x1xf32>
    %cst_5 = arith.constant 0.000000e+00 : f32
    %15 = vector.broadcast %cst_5 : f32 to vector<1x1x1xf32>
    %16 = arith.maximumf %14, %15 : vector<1x1x1xf32>
    %17 = math.sqrt %16 : vector<1x1x1xf32>
    %cst_6 = arith.constant 9.99999974E-6 : f32
    %18 = vector.broadcast %cst_6 : f32 to vector<1x1x1xf32>
    %19 = arith.addf %17, %18 : vector<1x1x1xf32>
    %20 = tpu.reciprocal %19 : vector<1x1x1xf32> -> vector<1x1x1xf32>
    %cst_7 = arith.constant 0.000000e+00 : f32
    %21 = vector.broadcast %cst_7 : f32 to vector<1x1x1xf32>
    %22 = arith.subf %21, %10 : vector<1x1x1xf32>
    %23 = arith.mulf %22, %20 : vector<1x1x1xf32>
    %c0_8 = arith.constant 0 : index
    %c0_9 = arith.constant 0 : index
    %24 = vector.load %arg2[%c0_8, %c0_9] : memref<8x1xf32, #tpu.memory_space<vmem>>, vector<8x1xf32>
    %c0_10 = arith.constant 0 : index
    %c0_11 = arith.constant 0 : index
    %25 = vector.load %arg3[%c0_10, %c0_11] : memref<8x1xf32, #tpu.memory_space<vmem>>, vector<8x1xf32>
    %26 = vector.broadcast %20 : vector<1x1x1xf32> to vector<1x8x128xf32>
    %27 = arith.mulf %3, %26 : vector<1x8x128xf32>
    %28 = vector.broadcast %23 : vector<1x1x1xf32> to vector<1x8x128xf32>
    %29 = arith.addf %27, %28 : vector<1x8x128xf32>
    %30 = vector.shape_cast %24 : vector<8x1xf32> to vector<1x8x1xf32>
    %31 = vector.broadcast %30 : vector<1x8x1xf32> to vector<1x8x128xf32>
    %32 = arith.mulf %29, %31 : vector<1x8x128xf32>
    %33 = vector.shape_cast %25 : vector<8x1xf32> to vector<1x8x1xf32>
    %34 = vector.broadcast %33 : vector<1x8x1xf32> to vector<1x8x128xf32>
    %35 = arith.addf %32, %34 : vector<1x8x128xf32>
    %c0_12 = arith.constant 0 : index
    %c0_13 = arith.constant 0 : index
    %c0_14 = arith.constant 0 : index
    %36 = vector.load %arg4[%c0_12, %c0_13, %c0_14] : memref<1x8x128xf32, #tpu.memory_space<vmem>>, vector<1x8x128xf32>
    tpu.vector_store %arg4[%c0_12, %c0_13, %c0_14], %35 {strides = array<i32>} : memref<1x8x128xf32, #tpu.memory_space<vmem>>, vector<1x8x128xf32>,
    return
  }
  func.func @transform_0(%arg0: i32) -> (i32, i32, i32) {
    %c0_i32 = arith.constant 0 : i32
    %c0_i32_0 = arith.constant 0 : i32
    %c0_i32_1 = arith.constant 0 : i32
    return %arg0, %c0_i32, %c0_i32_0 : i32, i32, i32
  }
  func.func @transform_1(%arg0: i32) -> (i32, i32) {
    %c0_i32 = arith.constant 0 : i32
    %c0_i32_0 = arith.constant 0 : i32
    %c0_i32_1 = arith.constant 0 : i32
    return %c0_i32, %c0_i32_0 : i32, i32
  }
  func.func @transform_2(%arg0: i32) -> (i32, i32) {
    %c0_i32 = arith.constant 0 : i32
    %c0_i32_0 = arith.constant 0 : i32
    %c0_i32_1 = arith.constant 0 : i32
    return %c0_i32, %c0_i32_0 : i32, i32
  }
  func.func @transform_3(%arg0: i32) -> (i32, i32, i32) {
    %c0_i32 = arith.constant 0 : i32
    %c0_i32_0 = arith.constant 0 : i32
    %c0_i32_1 = arith.constant 0 : i32
    return %arg0, %c0_i32, %c0_i32_0 : i32, i32, i32
  }
}

</mosaic_0001>

<llo_original>
// kernel: tpu_custom_call.1
$region0: #{tpu_custom_call.1}
  #allocation0 [shape = 'u32[]', space=smem, size = 0x4, offset = 0x4, fixed_abs, tag = 'smem constant byte address 0x4 - core index']
  #allocation1 [shape = 'u32[144,128]{1,0:T(1,128)}', space=vmem, size = 0x12000, scoped, tag = 'internal scratch']
  %s0 = inlined_call_operand.vmem [shape: f32[2,8,128], index: 0, kind: input, shape index: {}]
  %s1 = inlined_call_operand.vmem [shape: f32[8,1], index: 1, kind: input, shape index: {}]
  %s2 = inlined_call_operand.vmem [shape: f32[8,1], index: 2, kind: input, shape index: {}]
  %s3 = inlined_call_operand.hbm [shape: f32[2,8,128], index: 3, kind: output, shape index: {}]
  %s4 = sld [smem:[#allocation0]]
  $region45: #{tpu_custom_call.1} parent=0
    _
  %s6 = ssub.s32 1, %s4
  %s7 = scalar_select 0, %s6, %s4
  $region1: #{tpu_custom_call.1} parent=0
    #allocation2 [shape = 'u8[8192]{0}', space=vmem, size = 0x2000, scoped, tag = 'output window, operand 0']
    #allocation3 [shape = 's32[2]{0}', space=sflag, size = 0x8, scoped, tag = 'scoped memory for tpu_custom_call.1']
    %8 = vsyncpa [#allocation3], 0
    %s9 = scalar_lea.sflag [#allocation3], 1
    %10 = vsyncpa %s9, 0
    loop: start=0, step=1, limit=4
    $region2: #{tpu_custom_call.1} parent=1 // loop_pre_header
      _
    $region3: #{tpu_custom_call.1} parent=1 // loop_header
      %s12 = sphi 0, %s16
      %p13 = scmp.ge.s32.totalorder %s12, 4
      %s22 = sphi 0, %s24
      %s25 = sphi 0, %s22
      %s26 = sphi 0, %s25
      %s42 = sphi 0, %s26
      %s46 = sphi 0, %s46
      %s48 = sphi 0, %s46
      %s49 = sphi 0, %s48
      %s63 = sphi 0, %s49
      %s67 = sphi 0, %s67
      %s69 = sphi 0, %s67
      %s70 = sphi 0, %s69
      %s84 = sphi 0, %s70
      %s90 = sphi 0, %s92
      %s93 = sphi 0, %s90
      %s94 = sphi 0, %s93
      %s110 = sphi 0, %s94
    $region4: #{tpu_custom_call.1} parent=1 // loop_header_branch
      %15 = sbr.rel (%p13) target = $region8
    $region5: #{tpu_custom_call.1} parent=1 // loop_body
      %s17 = ssub.s32 %s12, 1
      %s18 = ssub.s32 %s12, 2
      %s19 = sadd.s32 %s12, 1
      %s20 = ssub.s32 %s12, %s19
      %p21 = scmp.eq.s32.totalorder %s20, 0
      %s23 = sadd.s32 %s22, 1
      %s24 = scalar_select %p21, %s22, %s23
      %p27 = pneg %p21
      %p28 = scmp.eq.s32.totalorder %s12, 1
      %p29 = por %p27, %p28
      %p30 = scmp.ne.s32.totalorder %s22, %s25
      %p31 = scmp.eq.s32.totalorder %s12, 0
      %p32 = por %p30, %p31
      %p33 = scmp.ne.s32.totalorder %s22, %s25
      %p34 = scmp.eq.s32.totalorder %s17, 1
      %p35 = por %p33, %p34
      %p36 = scmp.ne.s32.totalorder %s25, %s26
      %p37 = scmp.eq.s32.totalorder %s17, 0
      %p38 = por %p36, %p37
      %p39 = scmp.ne.s32.totalorder %s25, %s26
      %p40 = scmp.eq.s32.totalorder %s18, 1
      %p41 = por %p39, %p40
      %p43 = scmp.ne.s32.totalorder %s26, %s42
      %p44 = scmp.eq.s32.totalorder %s18, 0
      %p45 = por %p43, %p44
      %s47 = sadd.s32 %s46, 1
      %p50 = scmp.eq.s32.totalorder %s12, 1
      %p51 = scmp.ne.s32.totalorder %s46, %s48
      %p52 = scmp.eq.s32.totalorder %s12, 0
      %p53 = por %p51, %p52
      %p54 = scmp.ne.s32.totalorder %s46, %s48
      %p55 = scmp.eq.s32.totalorder %s17, 1
      %p56 = por %p54, %p55
      %p57 = scmp.ne.s32.totalorder %s48, %s49
      %p58 = scmp.eq.s32.totalorder %s17, 0
      %p59 = por %p57, %p58
      %p60 = scmp.ne.s32.totalorder %s48, %s49
      %p61 = scmp.eq.s32.totalorder %s18, 1
      %p62 = por %p60, %p61
      %p64 = scmp.ne.s32.totalorder %s49, %s63
      %p65 = scmp.eq.s32.totalorder %s18, 0
      %p66 = por %p64, %p65
      %s68 = sadd.s32 %s67, 1
      %p71 = scmp.eq.s32.totalorder %s12, 1
      %p72 = scmp.ne.s32.totalorder %s67, %s69
      %p73 = scmp.eq.s32.totalorder %s12, 0
      %p74 = por %p72, %p73
      %p75 = scmp.ne.s32.totalorder %s67, %s69
      %p76 = scmp.eq.s32.totalorder %s17, 1
      %p77 = por %p75, %p76
      %p78 = scmp.ne.s32.totalorder %s69, %s70
      %p79 = scmp.eq.s32.totalorder %s17, 0
      %p80 = por %p78, %p79
      %p81 = scmp.ne.s32.totalorder %s69, %s70
      %p82 = scmp.eq.s32.totalorder %s18, 1
      %p83 = por %p81, %p82
      %p85 = scmp.ne.s32.totalorder %s70, %s84
      %p86 = scmp.eq.s32.totalorder %s18, 0
      %p87 = por %p85, %p86
      %s88 = ssub.s32 %s12, %s19
      %p89 = scmp.eq.s32.totalorder %s88, 0
      %s91 = sadd.s32 %s90, 1
      %s92 = scalar_select %p89, %s90, %s91
      %p95 = pneg %p89
      %p96 = scmp.eq.s32.totalorder %s12, 1
      %p97 = por %p95, %p96
      %p98 = scmp.ne.s32.totalorder %s90, %s93
      %p99 = scmp.eq.s32.totalorder %s12, 0
      %p100 = por %p98, %p99
      %p101 = scmp.ne.s32.totalorder %s90, %s93
      %p102 = scmp.eq.s32.totalorder %s17, 1
      %p103 = por %p101, %p102
      %p104 = scmp.ne.s32.totalorder %s93, %s94
      %p105 = scmp.eq.s32.totalorder %s17, 0
      %p106 = por %p104, %p105
      %p107 = scmp.ne.s32.totalorder %s93, %s94
      %p108 = scmp.eq.s32.totalorder %s18, 1
      %p109 = por %p107, %p108
      %p111 = scmp.ne.s32.totalorder %s94, %s110
      %p112 = scmp.eq.s32.totalorder %s18, 0
      %p113 = por %p111, %p112
      %p114 = scmp.le.s32.totalorder 1, %s12
      %p115 = scmp.lt.s32.totalorder %s12, 3
      %p116 = pnand %p114, %p115
      %p117 = pneg %p116
      // Predicated region
      $region9: #{tpu_custom_call.1} parent=5 // pred_check
        _
      $region10: #{tpu_custom_call.1} parent=5 // pred_check_branch
        %119 = sbr.rel (%p116) target = $region12
      $region11: #{tpu_custom_call.1} parent=5 // pred_region
        %s120 = ssub.s32 %s12, 1
        // Predicated region
        $region13: #{tpu_custom_call.1} parent=11 // pred_check
          %p121 = pneg %p59
        $region14: #{tpu_custom_call.1} parent=11 // pred_check_branch
          %123 = sbr.rel (%p121) target = $region16
        $region15: #{tpu_custom_call.1} parent=11 // pred_region
          _
        $region16: #{tpu_custom_call.1} parent=11 // pred_fallthru
          _
        // Predicated region
        $region17: #{tpu_custom_call.1} parent=11 // pred_check
          %p124 = pneg %p80
        $region18: #{tpu_custom_call.1} parent=11 // pred_check_branch
          %126 = sbr.rel (%p124) target = $region20
        $region19: #{tpu_custom_call.1} parent=11 // pred_region
          _
        $region20: #{tpu_custom_call.1} parent=11 // pred_fallthru
          _
      $region12: #{tpu_custom_call.1} parent=5 // pred_fallthru
        _
      %p127 = scmp.lt.s32.totalorder %s12, 2
      // Predicated region
      $region21: #{tpu_custom_call.1} parent=5 // pred_check
        %p128 = pneg %p127
      $region22: #{tpu_custom_call.1} parent=5 // pred_check_branch
        %130 = sbr.rel (%p128) target = $region24
      $region23: #{tpu_custom_call.1} parent=5 // pred_region
        // Predicated region
        $region25: #{tpu_custom_call.1} parent=23 // pred_check
          %p131 = pneg %p32
        $region26: #{tpu_custom_call.1} parent=23 // pred_check_branch
          %133 = sbr.rel (%p131) target = $region28
        $region27: #{tpu_custom_call.1} parent=23 // pred_region
          %p134 = scmp.lt.s32.totalorder %s12, 1
          %s135 = scalar_select %p134, %s12, 1
          %s136 = smul.addr %s135, 8
          %s137 = scalar_lea.vmem %s0, %s136
        $region28: #{tpu_custom_call.1} parent=23 // pred_fallthru
          _
      $region24: #{tpu_custom_call.1} parent=5 // pred_fallthru
        _
      %p138 = scmp.le.s32.totalorder 1, %s12
      %p139 = scmp.lt.s32.totalorder %s12, 3
      %p140 = pnand %p138, %p139
      %p141 = pneg %p140
      // Predicated region
      $region29: #{tpu_custom_call.1} parent=5 // pred_check
        _
      $region30: #{tpu_custom_call.1} parent=5 // pred_check_branch
        %143 = sbr.rel (%p140) target = $region32
      $region31: #{tpu_custom_call.1} parent=5 // pred_region
        %s144 = ssub.s32 %s12, 1
        %p145 = scmp.lt.s32.totalorder %s17, 1
        %s146 = scalar_select %p145, %s17, 1
        %s147 = smul.addr %s146, 8
        %s148 = scalar_lea.vmem %s0, %s147
        %p149 = pneg %p38
        %p150 = pneg %p35
        %p151 = pneg %p59
        %p152 = pneg %p56
        %p153 = pneg %p80
        %p154 = pneg %p77
        %p155 = pneg %p106
        %p156 = pneg %p103
        %s157 = sand.u32 %s93, 1
        %s158 = scalar_lea.sflag [#allocation3], %s157
        %s159 = sand.u32 %s93, 1
        %s160 = smul.addr %s159, 8
        %s161 = scalar_lea.vmem [#allocation2], %s160
        %p162 = scmp.lt.s32.totalorder %s17, 1
        %s163 = scalar_select %p162, %s17, 1
        %s164 = smul.addr %s163, 8
        %s165 = scalar_lea.vmem %s0, %s164
        %v166 = vld [vmem:[%s165] sm:$0xff]
        %s168 = vtos %v166
        %v169 = vstv %s168
        %v171 = vsub.f32 %v166, %v169
        %172 = vadd.xlane.f32.xlu0 %v171
        %v173 = vpop.xlane.xlu0 %172
        %v174 = vrot.slane %v173, 4
        %v175 = vadd.f32 %v173, %v174
        %v176 = vrot.slane %v175, 2
        %v177 = vadd.f32 %v175, %v176
        %v178 = vrot.slane %v177, 1
        %v179 = vadd.f32 %v177, %v178
        %v180 = vmul.f32 %v171, %v171
        %181 = vadd.xlane.f32.xlu0 %v180
        %v182 = vpop.xlane.xlu0 %181
        %v183 = vrot.slane %v182, 4
        %v184 = vadd.f32 %v182, %v183
        %v185 = vrot.slane %v184, 2
        %v186 = vadd.f32 %v184, %v185
        %v187 = vrot.slane %v186, 1
        %v188 = vadd.f32 %v186, %v187
        %v189 = vrcp.pop 1024.0
        %v190 = vmul.f32 %v179, %v189
        %v191 = vmul.f32 %v179, %v190
        %v192 = vsub.f32 %v188, %v191
        %v193 = vrcp.pop 1023.0
        %v194 = vmul.f32 %v192, %v193
        %v195 = vmax.f32 %v194, 0.0
        %v196 = vrsqrt.pop %v195
        %v197 = vmul.f32 %v195, %v196
        %vm198 = vcmp.eq.f32.partialorder %v195, inf
        %v199 = vsel %vm198, %v195, %v197
        %vm200 = vcmp.eq.f32.partialorder %v195, 0.0
        %v201 = vand.u32 %v195, 2147483648
        %v202 = vsel %vm200, %v201, %v199
        %v203 = vadd.f32 %v202, 1e-05
        %v204 = vrcp.pop %v203
        %v205 = vsub.f32 0.0, %v190
        %v206 = vmul.f32 %v205, %v204
        %v207 = vld [vmem:[%s1] sm:$0xff]
        %v208 = vld [vmem:[%s2] sm:$0xff]
        %v209 = vmul.f32 %v171, %v204
        %v210 = vadd.f32 %v209, %v206
        %212 = vset.pattern.permute.xlu0 0
        %213 = vperm.xlu0 %212, %v207
        %v214 = vpop.permute.xlu0 %213
        %v216 = vmul.f32 %v210, %v214
        %218 = vset.pattern.permute.xlu0 0
        %219 = vperm.xlu0 %218, %v208
        %v220 = vpop.permute.xlu0 %219
        %v222 = vadd.f32 %v216, %v220
        %223 = vst [vmem:[%s161] sm:$0xff] %v222
        %s224 = sand.u32 %s93, 1
        %s225 = scalar_lea.sflag [#allocation3], %s224
        %s226 = sand.u32 %s93, 1
        %s227 = smul.addr %s226, 8
        %s228 = scalar_lea.vmem [#allocation2], %s227
        // Predicated region
        $region33: #{tpu_custom_call.1} parent=31 // pred_check
          %p229 = pneg %p103
        $region34: #{tpu_custom_call.1} parent=31 // pred_check_branch
          %231 = sbr.rel (%p229) target = $region36
        $region35: #{tpu_custom_call.1} parent=31 // pred_region
          %s233 = ssub.s32 128, 128
          %234 = vsyncadd %s225, %s233
          %s235 = smul.addr %s17, 128
          %s236 = scalar_lea.hbm %s3, %s235
          %s238 = sshll.u32 %s228, 4
          %s239 = int_to_ptr.vmem [resolvable:$true] %s238
          %241 = dma.vmem_to_hbm [thread:$0]  %s239, 128, %s236, %s225
        $region36: #{tpu_custom_call.1} parent=31 // pred_fallthru
          _
      $region32: #{tpu_custom_call.1} parent=5 // pred_fallthru
        _
      %p242 = scmp.le.s32.totalorder 2, %s12
      // Predicated region
      $region37: #{tpu_custom_call.1} parent=5 // pred_check
        %p243 = pneg %p242
      $region38: #{tpu_custom_call.1} parent=5 // pred_check_branch
        %245 = sbr.rel (%p243) target = $region40
      $region39: #{tpu_custom_call.1} parent=5 // pred_region
        %s246 = ssub.s32 %s12, 2
        // Predicated region
        $region41: #{tpu_custom_call.1} parent=39 // pred_check
          %p247 = pneg %p109
        $region42: #{tpu_custom_call.1} parent=39 // pred_check_branch
          %249 = sbr.rel (%p247) target = $region44
        $region43: #{tpu_custom_call.1} parent=39 // pred_region
          %s250 = sand.u32 %s94, 1
          %s251 = scalar_lea.sflag [#allocation3], %s250
          %s252 = sand.u32 %s94, 1
          %s253 = smul.addr %s252, 8
          %s254 = scalar_lea.vmem [#allocation2], %s253
          %255 = dma.done %s251, 128
        $region44: #{tpu_custom_call.1} parent=39 // pred_fallthru
          _
      $region40: #{tpu_custom_call.1} parent=5 // pred_fallthru
        _
    $region6: #{tpu_custom_call.1} parent=1 // loop_footer
      %s16 = sadd.s32 1, %s12
    $region7: #{tpu_custom_call.1} parent=1 // loop_footer_branch
      %11 = sbr.rel target = $region3
    $region8: #{tpu_custom_call.1} parent=1 // loop_exit
      _
    %256 = vsyncpa [#allocation3], 1
    %s257 = scalar_lea.sflag [#allocation3], 1
    %258 = vsyncpa %s257, 1

</llo_original>
